<compile_context>
chip_gen: v7x
topology: tpu7x:2x2x1
jax: 0.10.0
libtpu: 0.0.40
codegen_flags: <defaults>
</compile_context>

<pallas_src>
import jax
import jax.numpy as jnp
import numpy as np
from jax.experimental import pallas as pl
from jax.experimental.pallas import tpu as pltpu


def _sinembed_kernel(x_ref, w_ref, phase_ref, o_ref):
    # x_ref:     (TM, 3)        coordinates for TM points
    # w_ref:     (3, OUT)       one-hot coord selector * (1/scale); 0 in tail cols
    # phase_ref: (1, OUT)       pi/2 on cos columns, 0 on sin / tail columns
    # o_ref:     (TM, OUT)
    arg = jnp.dot(x_ref[...], w_ref[...],
                  preferred_element_type=jnp.float32,
                  precision=jax.lax.Precision.HIGHEST)   # MXU, ~f32 accurate
    # cos(x) == sin(x + pi/2); tail columns have arg == 0 and phase == 0,
    # so sin gives the required zero padding with no extra mask.
    o_ref[...] = jnp.sin(arg + phase_ref[...]).astype(o_ref.dtype)


def _round_up(v, m):
    return -(-v // m) * m


def _choose_tm(m_rows, out_dim, vmem_budget_bytes=20 << 20):
    """Row tile: as tall as the VMEM budget allows (amortize ~0.35us/step),
    capped at 2048, never taller than the data, and small enough that the grid
    keeps >=2 steps so megacore chips (v7x) use both TensorCores.

    VMEM accounting (f32, (8,128)-tiled layout, double-buffered in & out):
      out tile: 2 * tm * round_up(out_dim, 128) * 4
      in  tile: 2 * tm * 128 * 4   ((tm, 3) still occupies one full lane group)
    """
    out_lanes = _round_up(out_dim, 128)
    bytes_per_row = 2 * 4 * (out_lanes + 128)
    max_tm = max(8, (vmem_budget_bytes // bytes_per_row) // 8 * 8)
    tm = min(2048, max_tm)
    tm = min(tm, max(8, _round_up(m_rows, 8)))
    if m_rows > 8:  # leave at least 2 grid steps for the two v7x TCs
        tm = min(tm, max(8, _round_up((m_rows + 1) // 2, 8)))
    return int(tm)


def sinusoidal_embedding_3d(x, out_dim, *, tm=None, out_dtype=jnp.float32):
    """x: (B, N, 3) float array -> (B, N, out_dim) in out_dtype (default f32).

    out_dtype=jnp.bfloat16 halves HBM store traffic (recommended on v6e where
    the kernel is store-bandwidth-bound); default f32 matches the PyTorch
    module's contract.
    """
    B, N, C = x.shape
    assert C == 3, "SinusoidalEmbedding3D expects 3-D coordinates"
    assert out_dim >= 6, "out_dim must be >= 6 (intermediate_dim would be 0)"
    inter = out_dim // 6 * 6
    d6 = inter // 6

    # Deterministic "parameters" (same construction as the PyTorch __init__).
    scale = (10000.0 ** (1.0 / inter)) ** (
        jnp.arange(d6, dtype=jnp.float32) * 6.0)                  # (d6,)

    # Per-output-column metadata; columns [inter, out_dim) are the zero tail.
    j = jnp.arange(out_dim)
    valid = j < inter
    k_idx = (j % (2 * d6)) // 2                                   # frequency index
    c_idx = j // (2 * d6)                                         # coordinate index
    inv_scale = jnp.where(valid, 1.0 / scale[k_idx], 0.0).astype(jnp.float32)
    # One-hot coordinate selector with 1/scale folded in -> single MXU dot.
    w = ((c_idx[None, :] == jnp.arange(3)[:, None]) & valid[None, :]
         ).astype(jnp.float32) * inv_scale[None, :]               # (3, out_dim)
    # pi/2 on (valid) cos columns, 0 on sin / tail columns.
    phase = jnp.where(valid & (j % 2 == 1), np.float32(np.pi / 2), 0.0
                      ).astype(jnp.float32)[None, :]              # (1, out_dim)

    M = B * N
    x2d = x.reshape(M, C).astype(jnp.float32)
    if tm is None:
        tm = _choose_tm(M, out_dim)
    else:
        tm = max(8, (int(tm) // 8) * 8)
    grid = (pl.cdiv(M, tm),)

    out2d = pl.pallas_call(
        _sinembed_kernel,
        out_shape=jax.ShapeDtypeStruct((M, out_dim), out_dtype),
        grid_spec=pltpu.PrefetchScalarGridSpec(
            num_scalar_prefetch=0,
            grid=grid,
            in_specs=[
                pl.BlockSpec((tm, C), lambda i: (i, 0)),
                pl.BlockSpec((C, out_dim), lambda i: (0, 0)),   # resident constants
                pl.BlockSpec((1, out_dim), lambda i: (0, 0)),
            ],
            out_specs=pl.BlockSpec((tm, out_dim), lambda i: (i, 0)),
        ),
        compiler_params=pltpu.CompilerParams(
            dimension_semantics=("parallel",),
            vmem_limit_bytes=32 << 20),
    )(x2d, w, phase)

    return out2d.reshape(B, N, out_dim)


def _reference(x, out_dim):
    # Pure-JAX mirror of the PyTorch forward, for verification.
    B, N, _ = x.shape
    inter = out_dim // 6 * 6
    d6 = inter // 6
    scale = (10000.0 ** (1.0 / inter)) ** (jnp.arange(d6, dtype=jnp.float32) * 6.0)
    arg = x[..., None].astype(jnp.float32) / scale                # (B, N, 3, d6)
    pe = jnp.stack([jnp.sin(arg), jnp.cos(arg)], axis=-1).reshape(B, N, inter)
    out = jnp.zeros((B, N, out_dim), jnp.float32)
    return out.at[..., :inter].set(pe)


if __name__ == "__main__":
    key0, key1 = jax.random.split(jax.random.PRNGKey(0))

    # Case 1: out_dim=32 -> intermediate_dim=30 (partial lane group + zero tail).
    B, N, out_dim = 2, 8, 32
    x = jax.random.normal(key0, (B, N, 3), dtype=jnp.float32)
    out = jax.block_until_ready(sinusoidal_embedding_3d(x, out_dim))
    ref = _reference(x, out_dim)
    assert out.shape == (B, N, out_dim)
    assert out.dtype == jnp.float32
    assert jnp.allclose(out, ref, atol=1e-5, rtol=1e-5), "mismatch vs reference (case 1)"

    # Case 2: row count not a multiple of the tile (exercises the boundary block).
    B2, N2, od2 = 2, 13, 20
    x2 = jax.random.normal(key1, (B2, N2, 3), dtype=jnp.float32)
    out2 = jax.block_until_ready(sinusoidal_embedding_3d(x2, od2))
    assert jnp.allclose(out2, _reference(x2, od2), atol=1e-5, rtol=1e-5), \
        "mismatch vs reference (case 2)"

    print("KERNEL_OK")
</pallas_src>

<mosaic_0001>
module attributes {stable_mosaic.version = 11 : i64} {
  func.func @_sinembed_kernel(%arg0: i32, %arg1: memref<8x3xf32, #tpu.memory_space<vmem>>, %arg2: memref<3x32xf32, #tpu.memory_space<vmem>>, %arg3: memref<1x32xf32, #tpu.memory_space<vmem>>, %arg4: memref<8x32xf32, #tpu.memory_space<vmem>>) attributes {dimension_semantics = [#tpu.dimension_semantics<parallel>], iteration_bounds = array<i64: 2>, scalar_prefetch = 0 : i64, scratch_operands = 0 : i64, tpu.core_type = #tpu.core_type<tc>, window_params = [{transform_indices = @transform_0, window_bounds = array<i64: 8, 3>}, {pipeline_mode = #tpu.pipeline_mode<synchronous>, transform_indices = @transform_1, window_bounds = array<i64: 3, 32>}, {pipeline_mode = #tpu.pipeline_mode<synchronous>, transform_indices = @transform_2, window_bounds = array<i64: 1, 32>}, {transform_indices = @transform_3, window_bounds = array<i64: 8, 32>}]} {
    %c0 = arith.constant 0 : index
    %c0_0 = arith.constant 0 : index
    %0 = vector.load %arg1[%c0, %c0_0] : memref<8x3xf32, #tpu.memory_space<vmem>>, vector<8x3xf32>
    %c0_1 = arith.constant 0 : index
    %c0_2 = arith.constant 0 : index
    %1 = vector.load %arg2[%c0_1, %c0_2] : memref<3x32xf32, #tpu.memory_space<vmem>>, vector<3x32xf32>
    %cst = arith.constant dense<0.000000e+00> : vector<8x32xf32>
    %2 = tpu.matmul %0, %1, %cst {dimension_numbers = #tpu.dot_dimension_numbers<[1], [0], [0], [1], [0, 0, 1, 1], [], []>, precision = #tpu.contract_precision<fp32>} : vector<8x3xf32>, vector<3x32xf32>, vector<8x32xf32> -> vector<8x32xf32>
    %c0_3 = arith.constant 0 : index
    %c0_4 = arith.constant 0 : index
    %3 = vector.load %arg3[%c0_3, %c0_4] : memref<1x32xf32, #tpu.memory_space<vmem>>, vector<1x32xf32>
    %4 = vector.broadcast %3 : vector<1x32xf32> to vector<8x32xf32>
    %5 = arith.addf %2, %4 : vector<8x32xf32>
    %6 = math.sin %5 : vector<8x32xf32>
    %c0_5 = arith.constant 0 : index
    %c0_6 = arith.constant 0 : index
    %7 = vector.load %arg4[%c0_5, %c0_6] : memref<8x32xf32, #tpu.memory_space<vmem>>, vector<8x32xf32>
    tpu.vector_store %arg4[%c0_5, %c0_6], %6 {strides = array<i32>} : memref<8x32xf32, #tpu.memory_space<vmem>>, vector<8x32xf32>,
    return
  }
  func.func @transform_0(%arg0: i32) -> (i32, i32) {
    %c0_i32 = arith.constant 0 : i32
    %c0_i32_0 = arith.constant 0 : i32
    return %arg0, %c0_i32 : i32, i32
  }
  func.func @transform_1(%arg0: i32) -> (i32, i32) {
    %c0_i32 = arith.constant 0 : i32
    %c0_i32_0 = arith.constant 0 : i32
    %c0_i32_1 = arith.constant 0 : i32
    return %c0_i32, %c0_i32_0 : i32, i32
  }
  func.func @transform_2(%arg0: i32) -> (i32, i32) {
    %c0_i32 = arith.constant 0 : i32
    %c0_i32_0 = arith.constant 0 : i32
    %c0_i32_1 = arith.constant 0 : i32
    return %c0_i32, %c0_i32_0 : i32, i32
  }
  func.func @transform_3(%arg0: i32) -> (i32, i32) {
    %c0_i32 = arith.constant 0 : i32
    %c0_i32_0 = arith.constant 0 : i32
    return %arg0, %c0_i32 : i32, i32
  }
}

</mosaic_0001>

<llo_original>
// kernel: tpu_custom_call.1
$region0: #{tpu_custom_call.1}
  #allocation0 [shape = 'u32[]', space=smem, size = 0x4, offset = 0x4, fixed_abs, tag = 'smem constant byte address 0x4 - core index']
  #allocation1 [shape = 'u32[144,128]{1,0:T(1,128)}', space=vmem, size = 0x12000, scoped, tag = 'internal scratch']
  %s0 = inlined_call_operand.vmem [shape: f32[16,3], index: 0, kind: input, shape index: {}]
  %s1 = inlined_call_operand.vmem [shape: f32[3,32], index: 1, kind: input, shape index: {}]
  %s2 = inlined_call_operand.vmem [shape: f32[1,32], index: 2, kind: input, shape index: {}]
  %s3 = inlined_call_operand.hbm [shape: f32[16,32], index: 3, kind: output, shape index: {}]
  %s4 = sld [smem:[#allocation0]]
  $region45: #{tpu_custom_call.1} parent=0
    _
  %s6 = ssub.s32 1, %s4
  %s7 = scalar_select 0, %s6, %s4
  $region1: #{tpu_custom_call.1} parent=0
    #allocation2 [shape = 'u8[8192]{0}', space=vmem, size = 0x2000, scoped, tag = 'output window, operand 0']
    #allocation3 [shape = 's32[2]{0}', space=sflag, size = 0x8, scoped, tag = 'scoped memory for tpu_custom_call.1']
    %8 = vsyncpa [#allocation3], 0
    %s9 = scalar_lea.sflag [#allocation3], 1
    %10 = vsyncpa %s9, 0
    loop: start=0, step=1, limit=4
    $region2: #{tpu_custom_call.1} parent=1 // loop_pre_header
      _
    $region3: #{tpu_custom_call.1} parent=1 // loop_header
      %s12 = sphi 0, %s16
      %p13 = scmp.ge.s32.totalorder %s12, 4
      %s22 = sphi 0, %s24
      %s25 = sphi 0, %s22
      %s26 = sphi 0, %s25
      %s42 = sphi 0, %s26
      %s46 = sphi 0, %s46
      %s48 = sphi 0, %s46
      %s49 = sphi 0, %s48
      %s63 = sphi 0, %s49
      %s67 = sphi 0, %s67
      %s69 = sphi 0, %s67
      %s70 = sphi 0, %s69
      %s84 = sphi 0, %s70
      %s90 = sphi 0, %s92
      %s93 = sphi 0, %s90
      %s94 = sphi 0, %s93
      %s110 = sphi 0, %s94
    $region4: #{tpu_custom_call.1} parent=1 // loop_header_branch
      %15 = sbr.rel (%p13) target = $region8
    $region5: #{tpu_custom_call.1} parent=1 // loop_body
      %s17 = ssub.s32 %s12, 1
      %s18 = ssub.s32 %s12, 2
      %s19 = sadd.s32 %s12, 1
      %s20 = ssub.s32 %s12, %s19
      %p21 = scmp.eq.s32.totalorder %s20, 0
      %s23 = sadd.s32 %s22, 1
      %s24 = scalar_select %p21, %s22, %s23
      %p27 = pneg %p21
      %p28 = scmp.eq.s32.totalorder %s12, 1
      %p29 = por %p27, %p28
      %p30 = scmp.ne.s32.totalorder %s22, %s25
      %p31 = scmp.eq.s32.totalorder %s12, 0
      %p32 = por %p30, %p31
      %p33 = scmp.ne.s32.totalorder %s22, %s25
      %p34 = scmp.eq.s32.totalorder %s17, 1
      %p35 = por %p33, %p34
      %p36 = scmp.ne.s32.totalorder %s25, %s26
      %p37 = scmp.eq.s32.totalorder %s17, 0
      %p38 = por %p36, %p37
      %p39 = scmp.ne.s32.totalorder %s25, %s26
      %p40 = scmp.eq.s32.totalorder %s18, 1
      %p41 = por %p39, %p40
      %p43 = scmp.ne.s32.totalorder %s26, %s42
      %p44 = scmp.eq.s32.totalorder %s18, 0
      %p45 = por %p43, %p44
      %s47 = sadd.s32 %s46, 1
      %p50 = scmp.eq.s32.totalorder %s12, 1
      %p51 = scmp.ne.s32.totalorder %s46, %s48
      %p52 = scmp.eq.s32.totalorder %s12, 0
      %p53 = por %p51, %p52
      %p54 = scmp.ne.s32.totalorder %s46, %s48
      %p55 = scmp.eq.s32.totalorder %s17, 1
      %p56 = por %p54, %p55
      %p57 = scmp.ne.s32.totalorder %s48, %s49
      %p58 = scmp.eq.s32.totalorder %s17, 0
      %p59 = por %p57, %p58
      %p60 = scmp.ne.s32.totalorder %s48, %s49
      %p61 = scmp.eq.s32.totalorder %s18, 1
      %p62 = por %p60, %p61
      %p64 = scmp.ne.s32.totalorder %s49, %s63
      %p65 = scmp.eq.s32.totalorder %s18, 0
      %p66 = por %p64, %p65
      %s68 = sadd.s32 %s67, 1
      %p71 = scmp.eq.s32.totalorder %s12, 1
      %p72 = scmp.ne.s32.totalorder %s67, %s69
      %p73 = scmp.eq.s32.totalorder %s12, 0
      %p74 = por %p72, %p73
      %p75 = scmp.ne.s32.totalorder %s67, %s69
      %p76 = scmp.eq.s32.totalorder %s17, 1
      %p77 = por %p75, %p76
      %p78 = scmp.ne.s32.totalorder %s69, %s70
      %p79 = scmp.eq.s32.totalorder %s17, 0
      %p80 = por %p78, %p79
      %p81 = scmp.ne.s32.totalorder %s69, %s70
      %p82 = scmp.eq.s32.totalorder %s18, 1
      %p83 = por %p81, %p82
      %p85 = scmp.ne.s32.totalorder %s70, %s84
      %p86 = scmp.eq.s32.totalorder %s18, 0
      %p87 = por %p85, %p86
      %s88 = ssub.s32 %s12, %s19
      %p89 = scmp.eq.s32.totalorder %s88, 0
      %s91 = sadd.s32 %s90, 1
      %s92 = scalar_select %p89, %s90, %s91
      %p95 = pneg %p89
      %p96 = scmp.eq.s32.totalorder %s12, 1
      %p97 = por %p95, %p96
      %p98 = scmp.ne.s32.totalorder %s90, %s93
      %p99 = scmp.eq.s32.totalorder %s12, 0
      %p100 = por %p98, %p99
      %p101 = scmp.ne.s32.totalorder %s90, %s93
      %p102 = scmp.eq.s32.totalorder %s17, 1
      %p103 = por %p101, %p102
      %p104 = scmp.ne.s32.totalorder %s93, %s94
      %p105 = scmp.eq.s32.totalorder %s17, 0
      %p106 = por %p104, %p105
      %p107 = scmp.ne.s32.totalorder %s93, %s94
      %p108 = scmp.eq.s32.totalorder %s18, 1
      %p109 = por %p107, %p108
      %p111 = scmp.ne.s32.totalorder %s94, %s110
      %p112 = scmp.eq.s32.totalorder %s18, 0
      %p113 = por %p111, %p112
      %p114 = scmp.le.s32.totalorder 1, %s12
      %p115 = scmp.lt.s32.totalorder %s12, 3
      %p116 = pnand %p114, %p115
      %p117 = pneg %p116
      // Predicated region
      $region9: #{tpu_custom_call.1} parent=5 // pred_check
        _
      $region10: #{tpu_custom_call.1} parent=5 // pred_check_branch
        %119 = sbr.rel (%p116) target = $region12
      $region11: #{tpu_custom_call.1} parent=5 // pred_region
        %s120 = ssub.s32 %s12, 1
        // Predicated region
        $region13: #{tpu_custom_call.1} parent=11 // pred_check
          %p121 = pneg %p59
        $region14: #{tpu_custom_call.1} parent=11 // pred_check_branch
          %123 = sbr.rel (%p121) target = $region16
        $region15: #{tpu_custom_call.1} parent=11 // pred_region
          _
        $region16: #{tpu_custom_call.1} parent=11 // pred_fallthru
          _
        // Predicated region
        $region17: #{tpu_custom_call.1} parent=11 // pred_check
          %p124 = pneg %p80
        $region18: #{tpu_custom_call.1} parent=11 // pred_check_branch
          %126 = sbr.rel (%p124) target = $region20
        $region19: #{tpu_custom_call.1} parent=11 // pred_region
          _
        $region20: #{tpu_custom_call.1} parent=11 // pred_fallthru
          _
      $region12: #{tpu_custom_call.1} parent=5 // pred_fallthru
        _
      %p127 = scmp.lt.s32.totalorder %s12, 2
      // Predicated region
      $region21: #{tpu_custom_call.1} parent=5 // pred_check
        %p128 = pneg %p127
      $region22: #{tpu_custom_call.1} parent=5 // pred_check_branch
        %130 = sbr.rel (%p128) target = $region24
      $region23: #{tpu_custom_call.1} parent=5 // pred_region
        // Predicated region
        $region25: #{tpu_custom_call.1} parent=23 // pred_check
          %p131 = pneg %p32
        $region26: #{tpu_custom_call.1} parent=23 // pred_check_branch
          %133 = sbr.rel (%p131) target = $region28
        $region27: #{tpu_custom_call.1} parent=23 // pred_region
          %p134 = scmp.lt.s32.totalorder %s12, 1
          %s135 = scalar_select %p134, %s12, 1
          %s136 = smul.addr %s135, 8
          %s137 = scalar_lea.vmem %s0, %s136
        $region28: #{tpu_custom_call.1} parent=23 // pred_fallthru
          _
      $region24: #{tpu_custom_call.1} parent=5 // pred_fallthru
        _
      %p138 = scmp.le.s32.totalorder 1, %s12
      %p139 = scmp.lt.s32.totalorder %s12, 3
      %p140 = pnand %p138, %p139
      %p141 = pneg %p140
      // Predicated region
      $region29: #{tpu_custom_call.1} parent=5 // pred_check
        _
      $region30: #{tpu_custom_call.1} parent=5 // pred_check_branch
        %143 = sbr.rel (%p140) target = $region32
      $region31: #{tpu_custom_call.1} parent=5 // pred_region
        %s144 = ssub.s32 %s12, 1
        %p145 = scmp.lt.s32.totalorder %s17, 1
        %s146 = scalar_select %p145, %s17, 1
        %s147 = smul.addr %s146, 8
        %s148 = scalar_lea.vmem %s0, %s147
        %p149 = pneg %p38
        %p150 = pneg %p35
        %p151 = pneg %p59
        %p152 = pneg %p56
        %p153 = pneg %p80
        %p154 = pneg %p77
        %p155 = pneg %p106
        %p156 = pneg %p103
        %s157 = sand.u32 %s93, 1
        %s158 = scalar_lea.sflag [#allocation3], %s157
        %s159 = sand.u32 %s93, 1
        %s160 = smul.addr %s159, 8
        %s161 = scalar_lea.vmem [#allocation2], %s160
        %p162 = scmp.lt.s32.totalorder %s17, 1
        %s163 = scalar_select %p162, %s17, 1
        %s164 = smul.addr %s163, 8
        %s165 = scalar_lea.vmem %s0, %s164
        %v166 = vld [vmem:[%s165] sm:$0xff]
        %v167 = vld [vmem:[%s1] sm:$0x7]
        %v168 = vld [vmem:[%s2] sm:$0x1]
        %v170 = vlaneseq
        %v171 = vshrl.u32 %v170, 7
        %v172 = vsub.s32 0, %v171
        %v173 = vrot.slane %v168, %v172
        %vm175 = vcmask 23552
        %v177 = vsel %vm175, %v166, 0
        %vm179 = vcmask 1042432
        %v181 = vsel %vm179, %v167, 0
        %183 = vmatprep.subr.mxu0 0.0
        %v184 = vand.u32 %v181, 4294901760
        %185 = vmatpush1.msra.mxu0 %v184
        %186 = vmatprep.subr.mxu0 0.0
        %187 = vmatpush1.msra.mxu0 0.0
        %188 = vmatprep.subr.mxu0 0.0
        %189 = vmatpush1.msra.mxu0 0.0
        %190 = vmatprep.subr.mxu0 0.0
        %191 = vmatpush1.msra.mxu0 0.0
        %192 = vmatprep.subr.mxu0 0.0
        %193 = vmatpush1.msra.mxu0 0.0
        %194 = vmatprep.subr.mxu0 0.0
        %195 = vmatpush1.msra.mxu0 0.0
        %196 = vmatprep.subr.mxu0 0.0
        %197 = vmatpush1.msra.mxu0 0.0
        %198 = vmatprep.subr.mxu0 0.0
        %199 = vmatpush1.msra.mxu0 0.0
        %200 = vmatprep.subr.mxu0 0.0
        %201 = vmatpush1.msra.mxu0 0.0
        %202 = vmatprep.subr.mxu0 0.0
        %203 = vmatpush1.msra.mxu0 0.0
        %204 = vmatprep.subr.mxu0 0.0
        %205 = vmatpush1.msra.mxu0 0.0
        %206 = vmatprep.subr.mxu0 0.0
        %207 = vmatpush1.msra.mxu0 0.0
        %208 = vmatprep.subr.mxu0 0.0
        %209 = vmatpush1.msra.mxu0 0.0
        %210 = vmatprep.subr.mxu0 0.0
        %211 = vmatpush1.msra.mxu0 0.0
        %212 = vmatprep.subr.mxu0 0.0
        %213 = vmatpush1.msra.mxu0 0.0
        %214 = vmatprep.subr.mxu0 0.0
        %215 = vmatpush1.msra.mxu0 0.0
        %216 = vmatprep.subr.mxu0 0.0
        %217 = vmatpush1.msra.mxu0 0.0
        %218 = vmatprep.subr.mxu0 0.0
        %219 = vmatpush1.msra.mxu0 0.0
        %220 = vmatprep.subr.mxu0 0.0
        %221 = vmatpush1.msra.mxu0 0.0
        %222 = vmatprep.subr.mxu0 0.0
        %223 = vmatpush1.msra.mxu0 0.0
        %224 = vmatprep.subr.mxu0 0.0
        %225 = vmatpush1.msra.mxu0 0.0
        %226 = vmatprep.subr.mxu0 0.0
        %227 = vmatpush1.msra.mxu0 0.0
        %228 = vmatprep.subr.mxu0 0.0
        %229 = vmatpush1.msra.mxu0 0.0
        %230 = vmatprep.subr.mxu0 0.0
        %231 = vmatpush1.msra.mxu0 0.0
        %232 = vmatprep.subr.mxu0 0.0
        %233 = vmatpush1.msra.mxu0 0.0
        %234 = vmatprep.subr.mxu0 0.0
        %235 = vmatpush1.msra.mxu0 0.0
        %236 = vmatprep.subr.mxu0 0.0
        %237 = vmatpush1.msra.mxu0 0.0
        %238 = vmatprep.subr.mxu0 0.0
        %239 = vmatpush1.msra.mxu0 0.0
        %240 = vmatprep.subr.mxu0 0.0
        %241 = vmatpush1.msra.mxu0 0.0
        %242 = vmatprep.subr.mxu0 0.0
        %243 = vmatpush1.msra.mxu0 0.0
        %244 = vmatprep.subr.mxu0 0.0
        %245 = vmatpush1.msra.mxu0 0.0
        %246 = vmatprep.subr.mxu0 0.0
        %247 = vmatpush1.msra.mxu0 0.0
        %248 = vmatprep.mubr.f32.mxu0 0.0
        %v249 = vand.u32 %v177, 4294901760
        %v250 = vsub.f32 %v177, %v249
        %v251 = vand.u32 %v250, 4294901760
        %v252 = vsub.f32 %v250, %v251
        %v253 = vand.u32 %v252, 4294901760
        %254 = vmatmul.mubr.f32.gmra.mrb[0].mxu0 %v253
        %v255 = vpop.f32.mrb[0].mxu0
        %v256 = vadd.f32 %v173, %v255
        %v257 = vpop.f32.mrb[0].mxu0
        %258 = vdwg.mxu0
        %259 = vmatprep.subr.mxu0 0.0
        %v260 = vand.u32 %v181, 4294901760
        %v261 = vsub.f32 %v181, %v260
        %v262 = vand.u32 %v261, 4294901760
        %v263 = vsub.f32 %v261, %v262
        %v264 = vand.u32 %v263, 4294901760
        %265 = vmatpush1.msra.mxu0 %v264
        %266 = vmatprep.subr.mxu0 0.0
        %267 = vmatpush1.msra.mxu0 0.0
        %268 = vmatprep.subr.mxu0 0.0
        %269 = vmatpush1.msra.mxu0 0.0
        %270 = vmatprep.subr.mxu0 0.0
        %271 = vmatpush1.msra.mxu0 0.0
        %272 = vmatprep.subr.mxu0 0.0
        %273 = vmatpush1.msra.mxu0 0.0
        %274 = vmatprep.subr.mxu0 0.0
        %275 = vmatpush1.msra.mxu0 0.0
        %276 = vmatprep.subr.mxu0 0.0
        %277 = vmatpush1.msra.mxu0 0.0
        %278 = vmatprep.subr.mxu0 0.0
        %279 = vmatpush1.msra.mxu0 0.0
        %280 = vmatprep.subr.mxu0 0.0
        %281 = vmatpush1.msra.mxu0 0.0
        %282 = vmatprep.subr.mxu0 0.0
        %283 = vmatpush1.msra.mxu0 0.0
        %284 = vmatprep.subr.mxu0 0.0
        %285 = vmatpush1.msra.mxu0 0.0
        %286 = vmatprep.subr.mxu0 0.0
        %287 = vmatpush1.msra.mxu0 0.0
        %288 = vmatprep.subr.mxu0 0.0
        %289 = vmatpush1.msra.mxu0 0.0
        %290 = vmatprep.subr.mxu0 0.0
        %291 = vmatpush1.msra.mxu0 0.0
        %292 = vmatprep.subr.mxu0 0.0
        %293 = vmatpush1.msra.mxu0 0.0
        %294 = vmatprep.subr.mxu0 0.0
        %295 = vmatpush1.msra.mxu0 0.0
        %296 = vmatprep.subr.mxu0 0.0
        %297 = vmatpush1.msra.mxu0 0.0
        %298 = vmatprep.subr.mxu0 0.0
        %299 = vmatpush1.msra.mxu0 0.0
        %300 = vmatprep.subr.mxu0 0.0
        %301 = vmatpush1.msra.mxu0 0.0
        %302 = vmatprep.subr.mxu0 0.0
        %303 = vmatpush1.msra.mxu0 0.0
        %304 = vmatprep.subr.mxu0 0.0
        %305 = vmatpush1.msra.mxu0 0.0
        %306 = vmatprep.subr.mxu0 0.0
        %307 = vmatpush1.msra.mxu0 0.0
        %308 = vmatprep.subr.mxu0 0.0
        %309 = vmatpush1.msra.mxu0 0.0
        %310 = vmatprep.subr.mxu0 0.0
        %311 = vmatpush1.msra.mxu0 0.0
        %312 = vmatprep.subr.mxu0 0.0
        %313 = vmatpush1.msra.mxu0 0.0
        %314 = vmatprep.subr.mxu0 0.0
        %315 = vmatpush1.msra.mxu0 0.0
        %316 = vmatprep.subr.mxu0 0.0
        %317 = vmatpush1.msra.mxu0 0.0
        %318 = vmatprep.subr.mxu0 0.0
        %319 = vmatpush1.msra.mxu0 0.0
        %320 = vmatprep.subr.mxu0 0.0
        %321 = vmatpush1.msra.mxu0 0.0
        %322 = vmatprep.subr.mxu0 0.0
        %323 = vmatpush1.msra.mxu0 0.0
        %324 = vmatprep.subr.mxu0 0.0
        %325 = vmatpush1.msra.mxu0 0.0
        %326 = vmatprep.subr.mxu0 0.0
        %327 = vmatpush1.msra.mxu0 0.0
        %328 = vmatprep.mubr.f32.mxu0 0.0
        %v329 = vand.u32 %v177, 4294901760
        %330 = vmatmul.mubr.f32.gmra.mrb[0].mxu0 %v329
        %v331 = vpop.f32.mrb[0].mxu0
        %v332 = vadd.f32 %v256, %v331
        %v333 = vpop.f32.mrb[0].mxu0
        %334 = vdwg.mxu0
        %335 = vmatprep.subr.mxu0 0.0
        %v336 = vand.u32 %v181, 4294901760
        %v337 = vsub.f32 %v181, %v336
        %338 = vmatpush1.msra.mxu0 %v337
        %339 = vmatprep.subr.mxu0 0.0
        %340 = vmatpush1.msra.mxu0 0.0
        %341 = vmatprep.subr.mxu0 0.0
        %342 = vmatpush1.msra.mxu0 0.0
        %343 = vmatprep.subr.mxu0 0.0
        %344 = vmatpush1.msra.mxu0 0.0
        %345 = vmatprep.subr.mxu0 0.0
        %346 = vmatpush1.msra.mxu0 0.0
        %347 = vmatprep.subr.mxu0 0.0
        %348 = vmatpush1.msra.mxu0 0.0
        %349 = vmatprep.subr.mxu0 0.0
        %350 = vmatpush1.msra.mxu0 0.0
        %351 = vmatprep.subr.mxu0 0.0
        %352 = vmatpush1.msra.mxu0 0.0
        %353 = vmatprep.subr.mxu0 0.0
        %354 = vmatpush1.msra.mxu0 0.0
        %355 = vmatprep.subr.mxu0 0.0
        %356 = vmatpush1.msra.mxu0 0.0
        %357 = vmatprep.subr.mxu0 0.0
        %358 = vmatpush1.msra.mxu0 0.0
        %359 = vmatprep.subr.mxu0 0.0
        %360 = vmatpush1.msra.mxu0 0.0
        %361 = vmatprep.subr.mxu0 0.0
        %362 = vmatpush1.msra.mxu0 0.0
        %363 = vmatprep.subr.mxu0 0.0
        %364 = vmatpush1.msra.mxu0 0.0
        %365 = vmatprep.subr.mxu0 0.0
        %366 = vmatpush1.msra.mxu0 0.0
        %367 = vmatprep.subr.mxu0 0.0
        %368 = vmatpush1.msra.mxu0 0.0
        %369 = vmatprep.subr.mxu0 0.0
        %370 = vmatpush1.msra.mxu0 0.0
        %371 = vmatprep.subr.mxu0 0.0
        %372 = vmatpush1.msra.mxu0 0.0
        %373 = vmatprep.subr.mxu0 0.0
        %374 = vmatpush1.msra.mxu0 0.0
        %375 = vmatprep.subr.mxu0 0.0
        %376 = vmatpush1.msra.mxu0 0.0
        %377 = vmatprep.subr.mxu0 0.0
        %378 = vmatpush1.msra.mxu0 0.0
        %379 = vmatprep.subr.mxu0 0.0
        %380 = vmatpush1.msra.mxu0 0.0
        %381 = vmatprep.subr.mxu0 0.0
        %382 = vmatpush1.msra.mxu0 0.0
        %383 = vmatprep.subr.mxu0 0.0
        %384 = vmatpush1.msra.mxu0 0.0
        %385 = vmatprep.subr.mxu0 0.0
        %386 = vmatpush1.msra.mxu0 0.0
        %387 = vmatprep.subr.mxu0 0.0
        %388 = vmatpush1.msra.mxu0 0.0
        %389 = vmatprep.subr.mxu0 0.0
        %390 = vmatpush1.msra.mxu0 0.0
        %391 = vmatprep.subr.mxu0 0.0
        %392 = vmatpush1.msra.mxu0 0.0
        %393 = vmatprep.subr.mxu0 0.0
        %394 = vmatpush1.msra.mxu0 0.0
        %395 = vmatprep.subr.mxu0 0.0
        %396 = vmatpush1.msra.mxu0 0.0
        %397 = vmatprep.subr.mxu0 0.0
        %398 = vmatpush1.msra.mxu0 0.0
        %399 = vmatprep.subr.mxu0 0.0
        %400 = vmatpush1.msra.mxu0 0.0
        %401 = vmatprep.mubr.f32.mxu0 0.0
        %v402 = vand.u32 %v177, 4294901760
        %v403 = vsub.f32 %v177, %v402
        %404 = vmatmul.mubr.f32.gmra.mrb[0].mxu0 %v403
        %v405 = vpop.f32.mrb[0].mxu0
        %v406 = vadd.f32 %v332, %v405
        %v407 = vpop.f32.mrb[0].mxu0
        %408 = vdwg.mxu0
        %409 = vmatprep.subr.mxu0 0.0
        %v410 = vand.u32 %v181, 4294901760
        %411 = vmatpush1.msra.mxu0 %v410
        %412 = vmatprep.subr.mxu0 0.0
        %413 = vmatpush1.msra.mxu0 0.0
        %414 = vmatprep.subr.mxu0 0.0
        %415 = vmatpush1.msra.mxu0 0.0
        %416 = vmatprep.subr.mxu0 0.0
        %417 = vmatpush1.msra.mxu0 0.0
        %418 = vmatprep.subr.mxu0 0.0
        %419 = vmatpush1.msra.mxu0 0.0
        %420 = vmatprep.subr.mxu0 0.0
        %421 = vmatpush1.msra.mxu0 0.0
        %422 = vmatprep.subr.mxu0 0.0
        %423 = vmatpush1.msra.mxu0 0.0
        %424 = vmatprep.subr.mxu0 0.0
        %425 = vmatpush1.msra.mxu0 0.0
        %426 = vmatprep.subr.mxu0 0.0
        %427 = vmatpush1.msra.mxu0 0.0
        %428 = vmatprep.subr.mxu0 0.0
        %429 = vmatpush1.msra.mxu0 0.0
        %430 = vmatprep.subr.mxu0 0.0
        %431 = vmatpush1.msra.mxu0 0.0
        %432 = vmatprep.subr.mxu0 0.0
        %433 = vmatpush1.msra.mxu0 0.0
        %434 = vmatprep.subr.mxu0 0.0
        %435 = vmatpush1.msra.mxu0 0.0
        %436 = vmatprep.subr.mxu0 0.0
        %437 = vmatpush1.msra.mxu0 0.0
        %438 = vmatprep.subr.mxu0 0.0
        %439 = vmatpush1.msra.mxu0 0.0
        %440 = vmatprep.subr.mxu0 0.0
        %441 = vmatpush1.msra.mxu0 0.0
        %442 = vmatprep.subr.mxu0 0.0
        %443 = vmatpush1.msra.mxu0 0.0
        %444 = vmatprep.subr.mxu0 0.0
        %445 = vmatpush1.msra.mxu0 0.0
        %446 = vmatprep.subr.mxu0 0.0
        %447 = vmatpush1.msra.mxu0 0.0
        %448 = vmatprep.subr.mxu0 0.0
        %449 = vmatpush1.msra.mxu0 0.0
        %450 = vmatprep.subr.mxu0 0.0
        %451 = vmatpush1.msra.mxu0 0.0
        %452 = vmatprep.subr.mxu0 0.0
        %453 = vmatpush1.msra.mxu0 0.0
        %454 = vmatprep.subr.mxu0 0.0
        %455 = vmatpush1.msra.mxu0 0.0
        %456 = vmatprep.subr.mxu0 0.0
        %457 = vmatpush1.msra.mxu0 0.0
        %458 = vmatprep.subr.mxu0 0.0
        %459 = vmatpush1.msra.mxu0 0.0
        %460 = vmatprep.subr.mxu0 0.0
        %461 = vmatpush1.msra.mxu0 0.0
        %462 = vmatprep.subr.mxu0 0.0
        %463 = vmatpush1.msra.mxu0 0.0
        %464 = vmatprep.subr.mxu0 0.0
        %465 = vmatpush1.msra.mxu0 0.0
        %466 = vmatprep.subr.mxu0 0.0
        %467 = vmatpush1.msra.mxu0 0.0
        %468 = vmatprep.subr.mxu0 0.0
        %469 = vmatpush1.msra.mxu0 0.0
        %470 = vmatprep.subr.mxu0 0.0
        %471 = vmatpush1.msra.mxu0 0.0
        %472 = vmatprep.subr.mxu0 0.0
        %473 = vmatpush1.msra.mxu0 0.0
        %474 = vmatprep.mubr.f32.mxu0 0.0
        %v475 = vand.u32 %v177, 4294901760
        %v476 = vsub.f32 %v177, %v475
        %v477 = vand.u32 %v476, 4294901760
        %478 = vmatmul.mubr.f32.gmra.mrb[0].mxu0 %v477
        %v479 = vpop.f32.mrb[0].mxu0
        %v480 = vadd.f32 %v406, %v479
        %v481 = vpop.f32.mrb[0].mxu0
        %482 = vdwg.mxu0
        %483 = vmatprep.subr.mxu0 0.0
        %v484 = vand.u32 %v181, 4294901760
        %v485 = vsub.f32 %v181, %v484
        %v486 = vand.u32 %v485, 4294901760
        %487 = vmatpush1.msra.mxu0 %v486
        %488 = vmatprep.subr.mxu0 0.0
        %489 = vmatpush1.msra.mxu0 0.0
        %490 = vmatprep.subr.mxu0 0.0
        %491 = vmatpush1.msra.mxu0 0.0
        %492 = vmatprep.subr.mxu0 0.0
        %493 = vmatpush1.msra.mxu0 0.0
        %494 = vmatprep.subr.mxu0 0.0
        %495 = vmatpush1.msra.mxu0 0.0
        %496 = vmatprep.subr.mxu0 0.0
        %497 = vmatpush1.msra.mxu0 0.0
        %498 = vmatprep.subr.mxu0 0.0
        %499 = vmatpush1.msra.mxu0 0.0
        %500 = vmatprep.subr.mxu0 0.0
        %501 = vmatpush1.msra.mxu0 0.0
        %502 = vmatprep.subr.mxu0 0.0
        %503 = vmatpush1.msra.mxu0 0.0
        %504 = vmatprep.subr.mxu0 0.0
        %505 = vmatpush1.msra.mxu0 0.0
        %506 = vmatprep.subr.mxu0 0.0
        %507 = vmatpush1.msra.mxu0 0.0
        %508 = vmatprep.subr.mxu0 0.0
        %509 = vmatpush1.msra.mxu0 0.0
        %510 = vmatprep.subr.mxu0 0.0
        %511 = vmatpush1.msra.mxu0 0.0
        %512 = vmatprep.subr.mxu0 0.0
        %513 = vmatpush1.msra.mxu0 0.0
        %514 = vmatprep.subr.mxu0 0.0
        %515 = vmatpush1.msra.mxu0 0.0
        %516 = vmatprep.subr.mxu0 0.0
        %517 = vmatpush1.msra.mxu0 0.0
        %518 = vmatprep.subr.mxu0 0.0
        %519 = vmatpush1.msra.mxu0 0.0
        %520 = vmatprep.subr.mxu0 0.0
        %521 = vmatpush1.msra.mxu0 0.0
        %522 = vmatprep.subr.mxu0 0.0
        %523 = vmatpush1.msra.mxu0 0.0
        %524 = vmatprep.subr.mxu0 0.0
        %525 = vmatpush1.msra.mxu0 0.0
        %526 = vmatprep.subr.mxu0 0.0
        %527 = vmatpush1.msra.mxu0 0.0
        %528 = vmatprep.subr.mxu0 0.0
        %529 = vmatpush1.msra.mxu0 0.0
        %530 = vmatprep.subr.mxu0 0.0
        %531 = vmatpush1.msra.mxu0 0.0
        %532 = vmatprep.subr.mxu0 0.0
        %533 = vmatpush1.msra.mxu0 0.0
        %534 = vmatprep.subr.mxu0 0.0
        %535 = vmatpush1.msra.mxu0 0.0
        %536 = vmatprep.subr.mxu0 0.0
        %537 = vmatpush1.msra.mxu0 0.0
        %538 = vmatprep.subr.mxu0 0.0
        %539 = vmatpush1.msra.mxu0 0.0
        %540 = vmatprep.subr.mxu0 0.0
        %541 = vmatpush1.msra.mxu0 0.0
        %542 = vmatprep.subr.mxu0 0.0
        %543 = vmatpush1.msra.mxu0 0.0
        %544 = vmatprep.subr.mxu0 0.0
        %545 = vmatpush1.msra.mxu0 0.0
        %546 = vmatprep.subr.mxu0 0.0
        %547 = vmatpush1.msra.mxu0 0.0
        %548 = vmatprep.subr.mxu0 0.0
        %549 = vmatpush1.msra.mxu0 0.0
        %550 = vmatprep.mubr.f32.mxu0 0.0
        %v551 = vand.u32 %v177, 4294901760
        %552 = vmatmul.mubr.f32.gmra.mrb[0].mxu0 %v551
        %v553 = vpop.f32.mrb[0].mxu0
        %v554 = vadd.f32 %v480, %v553
        %v555 = vpop.f32.mrb[0].mxu0
        %556 = vdwg.mxu0
        %557 = vmatprep.subr.mxu0 0.0
        %v558 = vand.u32 %v181, 4294901760
        %559 = vmatpush1.msra.mxu0 %v558
        %560 = vmatprep.subr.mxu0 0.0
        %561 = vmatpush1.msra.mxu0 0.0
        %562 = vmatprep.subr.mxu0 0.0
        %563 = vmatpush1.msra.mxu0 0.0
        %564 = vmatprep.subr.mxu0 0.0
        %565 = vmatpush1.msra.mxu0 0.0
        %566 = vmatprep.subr.mxu0 0.0
        %567 = vmatpush1.msra.mxu0 0.0
        %568 = vmatprep.subr.mxu0 0.0
        %569 = vmatpush1.msra.mxu0 0.0
        %570 = vmatprep.subr.mxu0 0.0
        %571 = vmatpush1.msra.mxu0 0.0
        %572 = vmatprep.subr.mxu0 0.0
        %573 = vmatpush1.msra.mxu0 0.0
        %574 = vmatprep.subr.mxu0 0.0
        %575 = vmatpush1.msra.mxu0 0.0
        %576 = vmatprep.subr.mxu0 0.0
        %577 = vmatpush1.msra.mxu0 0.0
        %578 = vmatprep.subr.mxu0 0.0
        %579 = vmatpush1.msra.mxu0 0.0
        %580 = vmatprep.subr.mxu0 0.0
        %581 = vmatpush1.msra.mxu0 0.0
        %582 = vmatprep.subr.mxu0 0.0
        %583 = vmatpush1.msra.mxu0 0.0
        %584 = vmatprep.subr.mxu0 0.0
        %585 = vmatpush1.msra.mxu0 0.0
        %586 = vmatprep.subr.mxu0 0.0
        %587 = vmatpush1.msra.mxu0 0.0
        %588 = vmatprep.subr.mxu0 0.0
        %589 = vmatpush1.msra.mxu0 0.0
        %590 = vmatprep.subr.mxu0 0.0
        %591 = vmatpush1.msra.mxu0 0.0
        %592 = vmatprep.subr.mxu0 0.0
        %593 = vmatpush1.msra.mxu0 0.0
        %594 = vmatprep.subr.mxu0 0.0
        %595 = vmatpush1.msra.mxu0 0.0
        %596 = vmatprep.subr.mxu0 0.0
        %597 = vmatpush1.msra.mxu0 0.0
        %598 = vmatprep.subr.mxu0 0.0
        %599 = vmatpush1.msra.mxu0 0.0
        %600 = vmatprep.subr.mxu0 0.0
        %601 = vmatpush1.msra.mxu0 0.0
        %602 = vmatprep.subr.mxu0 0.0
        %603 = vmatpush1.msra.mxu0 0.0
        %604 = vmatprep.subr.mxu0 0.0
        %605 = vmatpush1.msra.mxu0 0.0
        %606 = vmatprep.subr.mxu0 0.0
        %607 = vmatpush1.msra.mxu0 0.0
        %608 = vmatprep.subr.mxu0 0.0
        %609 = vmatpush1.msra.mxu0 0.0
        %610 = vmatprep.subr.mxu0 0.0
        %611 = vmatpush1.msra.mxu0 0.0
        %612 = vmatprep.subr.mxu0 0.0
        %613 = vmatpush1.msra.mxu0 0.0
        %614 = vmatprep.subr.mxu0 0.0
        %615 = vmatpush1.msra.mxu0 0.0
        %616 = vmatprep.subr.mxu0 0.0
        %617 = vmatpush1.msra.mxu0 0.0
        %618 = vmatprep.subr.mxu0 0.0
        %619 = vmatpush1.msra.mxu0 0.0
        %620 = vmatprep.subr.mxu0 0.0
        %621 = vmatpush1.msra.mxu0 0.0
        %622 = vmatprep.mubr.f32.mxu0 0.0
        %v623 = vand.u32 %v177, 4294901760
        %624 = vmatmul.mubr.f32.gmra.mrb[0].mxu0 %v623
        %v625 = vpop.f32.mrb[0].mxu0
        %v626 = vadd.f32 %v554, %v625
        %v627 = vpop.f32.mrb[0].mxu0
        %628 = vdwg.mxu0
        %v629 = vand.u32 2147483647, %v626
        %vm630 = vcmp.le.f32.partialorder %v629, 0.7853982
        %vm631 = vcmp.lt.s32.totalorder %v626, 0
        %v632 = vand.u32 %v626, 2139095040
        %v633 = vshrl.u32 %v632, 23
        %v634 = vsub.s32 %v633, 127
        %v635 = vand.u32 2147483647, %v626
        %v636 = vand.u32 %v635, 8388607
        %v637 = vor.u32 %v636, 8388608
        %v638 = vsub.s32 0, %v637
        %v639 = vadd.s32 %v634, 1
        %vm640 = vcmp.gt.s32.totalorder %v639, 0
        %v641 = vsel %vm640, %v639, 0
        %v642 = vshrl.u32 %v641, 5
        %v643 = vand.u32 %v641, 31
        %v644 = vsub.s32 32, %v643
        %v645 = vshrl.u32 683565275, %v644
        %v646 = vshll.u32 683565275, %v643
        %v647 = vshrl.u32 2475754826, %v644
        %v648 = vor.u32 %v646, %v647
        %v649 = vshll.u32 2475754826, %v643
        %v650 = vshrl.u32 2131351028, %v644
        %v651 = vor.u32 %v649, %v650
        %v652 = vshll.u32 2131351028, %v643
        %v653 = vshrl.u32 2102212464, %v644
        %v654 = vor.u32 %v652, %v653
        %v655 = vshll.u32 2102212464, %v643
        %v656 = vshrl.u32 920167782, %v644
        %v657 = vor.u32 %v655, %v656
        %v658 = vshll.u32 920167782, %v643
        %v659 = vshrl.u32 1326507024, %v644
        %v660 = vor.u32 %v658, %v659
        %vm661 = vcmp.lt.s32.totalorder %v642, 1
        %vm662 = vcmp.lt.s32.totalorder %v642, 2
        %vm663 = vcmp.lt.s32.totalorder %v642, 3
        %vm664 = vcmp.lt.s32.totalorder %v642, 4
        %v665 = vsel %vm661, %v645, %v648
        %v666 = vsel %vm664, %v654, 2102212464
        %v667 = vsel %vm663, %v651, %v666
        %v668 = vsel %vm662, %v665, %v667
        %v669 = vsel %vm661, %v648, %v651
        %v670 = vsel %vm664, %v657, 920167782
        %v671 = vsel %vm663, %v654, %v670
        %v672 = vsel %vm662, %v669, %v671
        %v673 = vsel %vm661, %v651, %v654
        %v674 = vsel %vm664, %v660, 1326507024
        %v675 = vsel %vm663, %v657, %v674
        %v676 = vsel %vm662, %v673, %v675
        %v677 = vshll.u32 %v637, 8
        %v678 = vmul.u32.u64.compose %v677, %v676
        %v679 = vextract.low.u32 %v678
        %v680 = vextract.high.u32 %v678
        %v681 = vmul.u32.u64.compose %v677, %v672
        %v682 = vextract.low.u32 %v681
        %v683 = vextract.high.u32 %v681
        %v684 = vmul.u32 %v677, %v668
        %v685 = vadd.s32 %v680, %v682
        %vm686 = vc.u32 %v680, %v682
        %v687 = vadd.s32 %v683, 1
        %v688 = vsel %vm686, %v687, %v683
        %v689 = vadd.s32 %v684, %v688
        %v690 = vadd.s32 %v689, 536870912
        %v691 = vshrl.u32 %v690, 30
        %v692 = vshll.u32 %v691, 30
        %v693 = vsub.s32 %v689, %v692
        %vm694 = vcmp.lt.s32.totalorder %v693, 0
        %v695 = vsub.s32 0, %v693
        %v696 = vsel %vm694, %v695, %v693
        %v697 = vclz %v696
        %v698 = vsub.s32 %v697, 2
        %vm699 = vcmp.gt.s32.totalorder 0, %v698
        %v700 = vsel %vm699, 0, %v698
        %v701 = vsub.s32 32, %v700
        %v702 = vshll.u32 %v693, %v700
        %v703 = vshrl.u32 %v685, %v701
        %v704 = vor.u32 %v702, %v703
        %v705 = vsub.s32 4294967266, %v700
        %v706 = vadd.s32 %v705, 127
        %v707 = vshll.u32 %v706, 23
        %v708 = vor.u32 4788187, %v707
        %v709 = vand.u32 2147483647, %v708
        %v711 = vcvt.s32.f32 %v704
        %v712 = vmul.f32 %v711, %v709
        %v713 = vxor.u32 %v712, 2147483648
        %v714 = vsel %vm631, %v713, %v712
        %v715 = vsub.s32 4, %v691
        %v716 = vsel %vm631, %v715, %v691
        %v717 = vsel %vm630, %v626, %v714
        %v718 = vsel %vm630, 0, %v716
        %v719 = vcosq.f32.pop %v717
        %v720 = vsinq.f32.pop %v717
        %vm721 = vweird.f32 %v626
        %v722 = vadd.s32 %v718, 3
        %v723 = vand.u32 %v722, 3
        %vm724 = vcmp.lt.s32.totalorder %v723, 2
        %vm725 = vcmp.eq.s32.totalorder %v723, 0
        %v726 = vxor.u32 %v720, 2147483648
        %v727 = vsel %vm725, %v719, %v726
        %vm728 = vcmp.eq.s32.totalorder %v723, 2
        %v729 = vxor.u32 %v719, 2147483648
        %v730 = vsel %vm728, %v729, %v720
        %v731 = vsel %vm724, %v727, %v730
        %v732 = vsel %vm721, nan, %v731
        %vm733 = vcmask 261120
        %734 = vst.msk [vmem:[%s161] sm:$0xff] %vm733, %v732
        %s735 = sand.u32 %s93, 1
        %s736 = scalar_lea.sflag [#allocation3], %s735
        %s737 = sand.u32 %s93, 1
        %s738 = smul.addr %s737, 8
        %s739 = scalar_lea.vmem [#allocation2], %s738
        // Predicated region
        $region33: #{tpu_custom_call.1} parent=31 // pred_check
          %p740 = pneg %p103
        $region34: #{tpu_custom_call.1} parent=31 // pred_check_branch
          %742 = sbr.rel (%p740) target = $region36
        $region35: #{tpu_custom_call.1} parent=31 // pred_region
          %s744 = ssub.s32 128, 128
          %745 = vsyncadd %s736, %s744
          %s746 = smul.addr %s17, 128
          %s747 = scalar_lea.hbm %s3, %s746
          %s749 = sshll.u32 %s739, 4
          %s750 = int_to_ptr.vmem [resolvable:$true] %s749
          %752 = dma.vmem_to_hbm [thread:$0]  %s750, 128, %s747, %s736
        $region36: #{tpu_custom_call.1} parent=31 // pred_fallthru
          _
      $region32: #{tpu_custom_call.1} parent=5 // pred_fallthru
        _
      %p753 = scmp.le.s32.totalorder 2, %s12
      // Predicated region
      $region37: #{tpu_custom_call.1} parent=5 // pred_check
        %p754 = pneg %p753
      $region38: #{tpu_custom_call.1} parent=5 // pred_check_branch
        %756 = sbr.rel (%p754) target = $region40
      $region39: #{tpu_custom_call.1} parent=5 // pred_region
        %s757 = ssub.s32 %s12, 2
        // Predicated region
        $region41: #{tpu_custom_call.1} parent=39 // pred_check
          %p758 = pneg %p109
        $region42: #{tpu_custom_call.1} parent=39 // pred_check_branch
          %760 = sbr.rel (%p758) target = $region44
        $region43: #{tpu_custom_call.1} parent=39 // pred_region
          %s761 = sand.u32 %s94, 1
          %s762 = scalar_lea.sflag [#allocation3], %s761
          %s763 = sand.u32 %s94, 1
          %s764 = smul.addr %s763, 8
          %s765 = scalar_lea.vmem [#allocation2], %s764
          %766 = dma.done %s762, 128
        $region44: #{tpu_custom_call.1} parent=39 // pred_fallthru
          _
      $region40: #{tpu_custom_call.1} parent=5 // pred_fallthru
        _
    $region6: #{tpu_custom_call.1} parent=1 // loop_footer
      %s16 = sadd.s32 1, %s12
    $region7: #{tpu_custom_call.1} parent=1 // loop_footer_branch
      %11 = sbr.rel target = $region3
    $region8: #{tpu_custom_call.1} parent=1 // loop_exit
      _
    %767 = vsyncpa [#allocation3], 1
    %s768 = scalar_lea.sflag [#allocation3], 1
    %769 = vsyncpa %s768, 1

</llo_original>
